<compile_context>
chip_gen: v7x
topology: tpu7x:2x2x1
jax: 0.10.0
libtpu: 0.0.40
codegen_flags: <defaults>
</compile_context>

<pallas_src>
import jax
import jax.numpy as jnp
from jax.experimental import pallas as pl
from jax.experimental.pallas import tpu as pltpu

H1 = 256
H2 = 128


def _round_up(n, m):
    return ((n + m - 1) // m) * m


def _attention_kernel(x_ref, w1_ref, b1_ref, w2_ref, b2_ref, w3_ref, b3_ref,
                      inv_temp_ref, weighted_ref, weights_ref):
    # ---- Linear(F,256) + folded eval BatchNorm + ReLU (bf16 MXU, f32 acc) ----
    xb = x_ref[...].astype(jnp.bfloat16)          # only the bf16 copy stays live
    h1 = jnp.dot(xb, w1_ref[...], preferred_element_type=jnp.float32) + b1_ref[...]
    h1 = jnp.maximum(h1, 0.0)
    # Dropout(0.3): identity in eval mode.

    # ---- Linear(256,128) + ReLU ----
    h2 = jnp.dot(h1.astype(jnp.bfloat16), w2_ref[...],
                 preferred_element_type=jnp.float32) + b2_ref[...]
    h2 = jnp.maximum(h2, 0.0)
    # Dropout(0.2): identity in eval mode.

    # ---- Linear(128,F) + Sigmoid ----
    logits = jnp.dot(h2.astype(jnp.bfloat16), w3_ref[...],
                     preferred_element_type=jnp.float32) + b3_ref[...]
    # sigmoid(z) = 1 / (1 + exp(-z)); approximate reciprocal runs on the EUP.
    w = pl.reciprocal(1.0 + jnp.exp(-logits), approx=True)
    # second sigmoid with the learned temperature (1/T folded on the host)
    w = pl.reciprocal(1.0 + jnp.exp(-(w * inv_temp_ref[0])), approx=True)

    weights_ref[...] = w
    # Re-read the x block from VMEM (cheap vld; load slots have slack) instead
    # of keeping the (TILE_B, F_pad) f32 value live across the whole body.
    weighted_ref[...] = x_ref[...] * w


def improved_feature_attention(features, params, *, max_tile_b=1024):
    """features: (B, F) float32.  params: dict of weights (see init_params)."""
    B, F = features.shape
    F_pad = _round_up(max(F, 128), 128)

    # ---- generation-aware VMEM budget ----
    try:
        vmem_cap = int(pltpu.get_tpu_info().vmem_capacity_bytes)
    except Exception:
        vmem_cap = 64 << 20                       # conservative (v7x per-TC)
    vmem_budget = int(0.8 * vmem_cap)

    # ---- single-buffer the resident weights if pipeline_mode is available ----
    try:
        pl.BlockSpec((8, 128), lambda i: (0, 0), pipeline_mode=pl.Buffered(1))
        single_buf_weights = True
    except (TypeError, AttributeError):
        single_buf_weights = False
    wbuf = 1 if single_buf_weights else 2
    weight_bytes = wbuf * ((F_pad * H1 + H1 * H2 + H2 * F_pad) * 2
                           + (H1 + H2 + F_pad) * 4)

    # ---- batch tile: largest that fits VMEM, capped, and >= 2 grid steps ----
    per_row = 2 * 3 * F_pad * 4                   # double-buffered x + 2 f32 outs
    slack = 4 << 20
    avail = max(vmem_budget - weight_bytes - slack, per_row * 8)
    tile_cap = max(8, min(max_tile_b, (avail // per_row) // 8 * 8))
    TILE_B = min(tile_cap, _round_up(B, 8))
    if TILE_B >= B:
        # split so the 'parallel' batch axis has >= 2 steps (v7x megacore)
        TILE_B = max(8, _round_up(-(-B // 2), 8))
    B_pad = _round_up(B, TILE_B)

    # ---- host-side folds (exact in f32) ----
    eps = 1e-5
    s = params["bn_gamma"] / jnp.sqrt(params["bn_running_var"] + eps)
    w1 = params["w1"] * s[None, :]
    b1 = params["b1"] * s + params["bn_beta"] - params["bn_running_mean"] * s
    w2, b2 = params["w2"], params["b2"]
    w3, b3 = params["w3"], params["b3"]
    inv_temp = (1.0 / params["temperature"]).reshape(1).astype(jnp.float32)

    # ---- pad to lane-dense / tile-aligned shapes ----
    x = features
    if F_pad != F:
        x = jnp.pad(x, ((0, 0), (0, F_pad - F)))
        w1 = jnp.pad(w1, ((0, F_pad - F), (0, 0)))
        w3 = jnp.pad(w3, ((0, 0), (0, F_pad - F)))
        b3 = jnp.pad(b3, ((0, F_pad - F),))
    if B_pad != B:
        x = jnp.pad(x, ((0, B_pad - B), (0, 0)))

    # bf16 resident weights for the MXU; biases / elementwise stay f32.
    w1 = w1.astype(jnp.bfloat16)
    w2 = w2.astype(jnp.bfloat16)
    w3 = w3.astype(jnp.bfloat16)

    grid = (B_pad // TILE_B,)

    def tiled(shape):
        return pl.BlockSpec(shape, lambda i: (i, 0))

    def resident(shape):
        if single_buf_weights:
            return pl.BlockSpec(shape, lambda i: (0, 0),
                                pipeline_mode=pl.Buffered(1))
        return pl.BlockSpec(shape, lambda i: (0, 0))

    # ---- tight VMEM accounting: resident weights (x1) + double-buffered I/O ----
    io_bytes = TILE_B * per_row
    vmem_limit = int(min(vmem_budget,
                         max(16 << 20, weight_bytes + io_bytes + slack)))

    flops = 2 * B_pad * (F_pad * H1 + H1 * H2 + H2 * F_pad)
    cost = pl.CostEstimate(
        flops=flops,
        transcendentals=4 * B_pad * F_pad,        # 2 sigmoids ~= 2*(exp + recip)
        bytes_accessed=3 * B_pad * F_pad * 4 + weight_bytes,
    )

    weighted, weights = pl.pallas_call(
        _attention_kernel,
        out_shape=(
            jax.ShapeDtypeStruct((B_pad, F_pad), jnp.float32),
            jax.ShapeDtypeStruct((B_pad, F_pad), jnp.float32),
        ),
        grid=grid,
        in_specs=[
            tiled((TILE_B, F_pad)),                              # x
            resident((F_pad, H1)),                               # W1 (BN-folded)
            resident((1, H1)),                                   # b1 (BN-folded)
            resident((H1, H2)),                                  # W2
            resident((1, H2)),                                   # b2
            resident((H2, F_pad)),                               # W3
            resident((1, F_pad)),                                # b3
            pl.BlockSpec(memory_space=pltpu.MemorySpace.SMEM),   # 1/temperature
        ],
        out_specs=(tiled((TILE_B, F_pad)), tiled((TILE_B, F_pad))),
        compiler_params=pltpu.CompilerParams(
            dimension_semantics=("parallel",),
            vmem_limit_bytes=vmem_limit,
        ),
        cost_estimate=cost,
    )(
        x,
        w1, b1.reshape(1, H1),
        w2, b2.reshape(1, H2),
        w3, b3.reshape(1, F_pad),
        inv_temp,
    )

    return weighted[:B, :F], weights[:B, :F]


def init_params(key, feature_dim):
    """Deterministic synthetic parameter init matching the module's shapes."""
    ks = jax.random.split(key, 3)

    def lin(k, fan_in, fan_out):
        bound = 1.0 / jnp.sqrt(fan_in)
        kw, kb = jax.random.split(k)
        w = jax.random.uniform(kw, (fan_in, fan_out), jnp.float32, -bound, bound)
        b = jax.random.uniform(kb, (fan_out,), jnp.float32, -bound, bound)
        return w, b

    w1, b1 = lin(ks[0], feature_dim, H1)
    w2, b2 = lin(ks[1], H1, H2)
    w3, b3 = lin(ks[2], H2, feature_dim)
    return {
        "w1": w1, "b1": b1,
        "bn_gamma": jnp.ones((H1,), jnp.float32),
        "bn_beta": jnp.zeros((H1,), jnp.float32),
        "bn_running_mean": jnp.zeros((H1,), jnp.float32),
        "bn_running_var": jnp.ones((H1,), jnp.float32),
        "w2": w2, "b2": b2,
        "w3": w3, "b3": b3,
        "temperature": jnp.ones((1,), jnp.float32),
    }


def _reference(features, params):
    eps = 1e-5
    h1 = features @ params["w1"] + params["b1"]
    h1 = (h1 - params["bn_running_mean"]) / jnp.sqrt(params["bn_running_var"] + eps)
    h1 = h1 * params["bn_gamma"] + params["bn_beta"]
    h1 = jnp.maximum(h1, 0.0)
    h2 = jnp.maximum(h1 @ params["w2"] + params["b2"], 0.0)
    w = jax.nn.sigmoid(h2 @ params["w3"] + params["b3"])
    w = jax.nn.sigmoid(w / params["temperature"][0])
    return features * w, w


def _check(B, F, kx, kp, atol=2e-2, rtol=2e-2, max_tile_b=1024):
    features = jax.random.normal(kx, (B, F), jnp.float32)
    params = init_params(kp, F)
    weighted, weights = improved_feature_attention(features, params,
                                                   max_tile_b=max_tile_b)
    jax.block_until_ready((weighted, weights))
    ref_weighted, ref_weights = _reference(features, params)
    assert weighted.shape == (B, F) and weights.shape == (B, F)
    assert jnp.allclose(weights, ref_weights, atol=atol, rtol=rtol)
    assert jnp.allclose(weighted, ref_weighted, atol=atol, rtol=rtol)


if __name__ == "__main__":
    key = jax.random.PRNGKey(0)
    k1, k2, k3, k4, k5, k6, k7, k8 = jax.random.split(key, 8)

    # Case 1: tiny ragged shapes exercise wrapper padding (B->16, F->128 lanes).
    _check(12, 64, k1, k2)
    # Case 2: small aligned shapes; auto-split into 2 grid steps (megacore).
    _check(32, 128, k3, k4)
    # Case 3: batch larger than one tile with a padded last tile.
    _check(260, 256, k5, k6)
    # Case 4: force a small tile cap to exercise a >2-step pipelined grid.
    _check(96, 128, k7, k8, max_tile_b=32)

    # TODO(synk): training-mode BatchNorm (batch statistics) and Dropout masks
    # are not modeled; kernel implements eval-mode forward semantics.
    print("KERNEL_OK")
</pallas_src>

<mosaic_0001>
module attributes {stable_mosaic.version = 11 : i64} {
  func.func @_attention_kernel(%arg0: i32, %arg1: memref<8x128xf32, #tpu.memory_space<vmem>>, %arg2: memref<128x256xbf16, #tpu.memory_space<vmem>>, %arg3: memref<1x256xf32, #tpu.memory_space<vmem>>, %arg4: memref<256x128xbf16, #tpu.memory_space<vmem>>, %arg5: memref<1x128xf32, #tpu.memory_space<vmem>>, %arg6: memref<128x128xbf16, #tpu.memory_space<vmem>>, %arg7: memref<1x128xf32, #tpu.memory_space<vmem>>, %arg8: memref<1xf32, #tpu.memory_space<smem>>, %arg9: memref<8x128xf32, #tpu.memory_space<vmem>>, %arg10: memref<8x128xf32, #tpu.memory_space<vmem>>) attributes {dimension_semantics = [#tpu.dimension_semantics<parallel>], iteration_bounds = array<i64: 2>, scalar_prefetch = 0 : i64, scratch_operands = 0 : i64, tpu.core_type = #tpu.core_type<tc>, window_params = [{transform_indices = @transform_0, window_bounds = array<i64: 8, 128>}, {pipeline_mode = #tpu.pipeline_mode<synchronous>, transform_indices = @transform_1, window_bounds = array<i64: 128, 256>}, {pipeline_mode = #tpu.pipeline_mode<synchronous>, transform_indices = @transform_2, window_bounds = array<i64: 1, 256>}, {pipeline_mode = #tpu.pipeline_mode<synchronous>, transform_indices = @transform_3, window_bounds = array<i64: 256, 128>}, {pipeline_mode = #tpu.pipeline_mode<synchronous>, transform_indices = @transform_4, window_bounds = array<i64: 1, 128>}, {pipeline_mode = #tpu.pipeline_mode<synchronous>, transform_indices = @transform_5, window_bounds = array<i64: 128, 128>}, {pipeline_mode = #tpu.pipeline_mode<synchronous>, transform_indices = @transform_6, window_bounds = array<i64: 1, 128>}, {transform_indices = @transform_7, window_bounds = array<i64: 1>}, {transform_indices = @transform_8, window_bounds = array<i64: 8, 128>}, {transform_indices = @transform_9, window_bounds = array<i64: 8, 128>}]} {
    %c0 = arith.constant 0 : index
    %c0_0 = arith.constant 0 : index
    %0 = vector.load %arg1[%c0, %c0_0] : memref<8x128xf32, #tpu.memory_space<vmem>>, vector<8x128xf32>
    %1 = arith.truncf %0 : vector<8x128xf32> to vector<8x128xbf16>
    %c0_1 = arith.constant 0 : index
    %c0_2 = arith.constant 0 : index
    %2 = vector.load %arg2[%c0_1, %c0_2] : memref<128x256xbf16, #tpu.memory_space<vmem>>, vector<128x256xbf16>
    %cst = arith.constant dense<0.000000e+00> : vector<8x256xf32>
    %3 = tpu.matmul %1, %2, %cst {dimension_numbers = #tpu.dot_dimension_numbers<[1], [0], [0], [1], [0, 0, 1, 1], [], []>} : vector<8x128xbf16>, vector<128x256xbf16>, vector<8x256xf32> -> vector<8x256xf32>
    %c0_3 = arith.constant 0 : index
    %c0_4 = arith.constant 0 : index
    %4 = vector.load %arg3[%c0_3, %c0_4] : memref<1x256xf32, #tpu.memory_space<vmem>>, vector<1x256xf32>
    %5 = vector.broadcast %4 : vector<1x256xf32> to vector<8x256xf32>
    %6 = arith.addf %3, %5 : vector<8x256xf32>
    %cst_5 = arith.constant 0.000000e+00 : f32
    %7 = vector.broadcast %cst_5 : f32 to vector<8x256xf32>
    %8 = arith.maximumf %6, %7 : vector<8x256xf32>
    %9 = arith.truncf %8 : vector<8x256xf32> to vector<8x256xbf16>
    %c0_6 = arith.constant 0 : index
    %c0_7 = arith.constant 0 : index
    %10 = vector.load %arg4[%c0_6, %c0_7] : memref<256x128xbf16, #tpu.memory_space<vmem>>, vector<256x128xbf16>
    %cst_8 = arith.constant dense<0.000000e+00> : vector<8x128xf32>
    %11 = tpu.matmul %9, %10, %cst_8 {dimension_numbers = #tpu.dot_dimension_numbers<[1], [0], [0], [1], [0, 0, 1, 1], [], []>} : vector<8x256xbf16>, vector<256x128xbf16>, vector<8x128xf32> -> vector<8x128xf32>
    %c0_9 = arith.constant 0 : index
    %c0_10 = arith.constant 0 : index
    %12 = vector.load %arg5[%c0_9, %c0_10] : memref<1x128xf32, #tpu.memory_space<vmem>>, vector<1x128xf32>
    %13 = vector.broadcast %12 : vector<1x128xf32> to vector<8x128xf32>
    %14 = arith.addf %11, %13 : vector<8x128xf32>
    %cst_11 = arith.constant 0.000000e+00 : f32
    %15 = vector.broadcast %cst_11 : f32 to vector<8x128xf32>
    %16 = arith.maximumf %14, %15 : vector<8x128xf32>
    %17 = arith.truncf %16 : vector<8x128xf32> to vector<8x128xbf16>
    %c0_12 = arith.constant 0 : index
    %c0_13 = arith.constant 0 : index
    %18 = vector.load %arg6[%c0_12, %c0_13] : memref<128x128xbf16, #tpu.memory_space<vmem>>, vector<128x128xbf16>
    %cst_14 = arith.constant dense<0.000000e+00> : vector<8x128xf32>
    %19 = tpu.matmul %17, %18, %cst_14 {dimension_numbers = #tpu.dot_dimension_numbers<[1], [0], [0], [1], [0, 0, 1, 1], [], []>} : vector<8x128xbf16>, vector<128x128xbf16>, vector<8x128xf32> -> vector<8x128xf32>
    %c0_15 = arith.constant 0 : index
    %c0_16 = arith.constant 0 : index
    %20 = vector.load %arg7[%c0_15, %c0_16] : memref<1x128xf32, #tpu.memory_space<vmem>>, vector<1x128xf32>
    %21 = vector.broadcast %20 : vector<1x128xf32> to vector<8x128xf32>
    %22 = arith.addf %19, %21 : vector<8x128xf32>
    %cst_17 = arith.constant 0.000000e+00 : f32
    %23 = vector.broadcast %cst_17 : f32 to vector<8x128xf32>
    %24 = arith.subf %23, %22 : vector<8x128xf32>
    %25 = math.exp %24 : vector<8x128xf32>
    %cst_18 = arith.constant 1.000000e+00 : f32
    %26 = vector.broadcast %cst_18 : f32 to vector<8x128xf32>
    %27 = arith.addf %26, %25 : vector<8x128xf32>
    %28 = tpu.reciprocal %27 {approx = true} : vector<8x128xf32> -> vector<8x128xf32>
    %c0_19 = arith.constant 0 : index
    %29 = memref.load %arg8[%c0_19] : memref<1xf32, #tpu.memory_space<smem>>
    %30 = vector.broadcast %29 : f32 to vector<8x128xf32>
    %31 = arith.mulf %28, %30 : vector<8x128xf32>
    %cst_20 = arith.constant 0.000000e+00 : f32
    %32 = vector.broadcast %cst_20 : f32 to vector<8x128xf32>
    %33 = arith.subf %32, %31 : vector<8x128xf32>
    %34 = math.exp %33 : vector<8x128xf32>
    %cst_21 = arith.constant 1.000000e+00 : f32
    %35 = vector.broadcast %cst_21 : f32 to vector<8x128xf32>
    %36 = arith.addf %35, %34 : vector<8x128xf32>
    %37 = tpu.reciprocal %36 {approx = true} : vector<8x128xf32> -> vector<8x128xf32>
    %c0_22 = arith.constant 0 : index
    %c0_23 = arith.constant 0 : index
    %38 = vector.load %arg10[%c0_22, %c0_23] : memref<8x128xf32, #tpu.memory_space<vmem>>, vector<8x128xf32>
    tpu.vector_store %arg10[%c0_22, %c0_23], %37 {strides = array<i32>} : memref<8x128xf32, #tpu.memory_space<vmem>>, vector<8x128xf32>,
    %c0_24 = arith.constant 0 : index
    %c0_25 = arith.constant 0 : index
    %39 = vector.load %arg1[%c0_24, %c0_25] : memref<8x128xf32, #tpu.memory_space<vmem>>, vector<8x128xf32>
    %40 = arith.mulf %39, %37 : vector<8x128xf32>
    %c0_26 = arith.constant 0 : index
    %c0_27 = arith.constant 0 : index
    %41 = vector.load %arg9[%c0_26, %c0_27] : memref<8x128xf32, #tpu.memory_space<vmem>>, vector<8x128xf32>
    tpu.vector_store %arg9[%c0_26, %c0_27], %40 {strides = array<i32>} : memref<8x128xf32, #tpu.memory_space<vmem>>, vector<8x128xf32>,
    return
  }
  func.func @transform_0(%arg0: i32) -> (i32, i32) {
    %c0_i32 = arith.constant 0 : i32
    %c0_i32_0 = arith.constant 0 : i32
    return %arg0, %c0_i32 : i32, i32
  }
  func.func @transform_1(%arg0: i32) -> (i32, i32) {
    %c0_i32 = arith.constant 0 : i32
    %c0_i32_0 = arith.constant 0 : i32
    %c0_i32_1 = arith.constant 0 : i32
    return %c0_i32, %c0_i32_0 : i32, i32
  }
  func.func @transform_2(%arg0: i32) -> (i32, i32) {
    %c0_i32 = arith.constant 0 : i32
    %c0_i32_0 = arith.constant 0 : i32
    %c0_i32_1 = arith.constant 0 : i32
    return %c0_i32, %c0_i32_0 : i32, i32
  }
  func.func @transform_3(%arg0: i32) -> (i32, i32) {
    %c0_i32 = arith.constant 0 : i32
    %c0_i32_0 = arith.constant 0 : i32
    %c0_i32_1 = arith.constant 0 : i32
    return %c0_i32, %c0_i32_0 : i32, i32
  }
  func.func @transform_4(%arg0: i32) -> (i32, i32) {
    %c0_i32 = arith.constant 0 : i32
    %c0_i32_0 = arith.constant 0 : i32
    %c0_i32_1 = arith.constant 0 : i32
    return %c0_i32, %c0_i32_0 : i32, i32
  }
  func.func @transform_5(%arg0: i32) -> (i32, i32) {
    %c0_i32 = arith.constant 0 : i32
    %c0_i32_0 = arith.constant 0 : i32
    %c0_i32_1 = arith.constant 0 : i32
    return %c0_i32, %c0_i32_0 : i32, i32
  }
  func.func @transform_6(%arg0: i32) -> (i32, i32) {
    %c0_i32 = arith.constant 0 : i32
    %c0_i32_0 = arith.constant 0 : i32
    %c0_i32_1 = arith.constant 0 : i32
    return %c0_i32, %c0_i32_0 : i32, i32
  }
  func.func @transform_7(%arg0: i32) -> i32 {
    %c0_i32 = arith.constant 0 : i32
    %c0_i32_0 = arith.constant 0 : i32
    return %c0_i32 : i32
  }
  func.func @transform_8(%arg0: i32) -> (i32, i32) {
    %c0_i32 = arith.constant 0 : i32
    %c0_i32_0 = arith.constant 0 : i32
    return %arg0, %c0_i32 : i32, i32
  }
  func.func @transform_9(%arg0: i32) -> (i32, i32) {
    %c0_i32 = arith.constant 0 : i32
    %c0_i32_0 = arith.constant 0 : i32
    return %arg0, %c0_i32 : i32, i32
  }
}

</mosaic_0001>

<llo_original>
// kernel: tpu_custom_call.1
$region0: #{tpu_custom_call.1}
  #allocation0 [shape = 'u32[]', space=smem, size = 0x4, offset = 0x4, fixed_abs, tag = 'smem constant byte address 0x4 - core index']
  #allocation1 [shape = 'u32[144,128]{1,0:T(1,128)}', space=vmem, size = 0x12000, scoped, tag = 'internal scratch']
  #allocation2 [shape = 'f32[1]{0:T(128)S(6)}', space=smem, size = 0x200, scoped, tag = 'scoped memory for tpu_custom_call.1']
  %s0 = inlined_call_operand.hbm [shape: f32[16,128], index: 0, kind: input, shape index: {}]
  %s1 = inlined_call_operand.hbm [shape: bf16[128,256], index: 1, kind: input, shape index: {}]
  %s2 = inlined_call_operand.vmem [shape: f32[1,256], index: 2, kind: input, shape index: {}]
  %s3 = inlined_call_operand.hbm [shape: bf16[256,128], index: 3, kind: input, shape index: {}]
  %s4 = inlined_call_operand.vmem [shape: f32[1,128], index: 4, kind: input, shape index: {}]
  %s5 = inlined_call_operand.hbm [shape: bf16[128,128], index: 5, kind: input, shape index: {}]
  %s6 = inlined_call_operand.vmem [shape: f32[1,128], index: 6, kind: input, shape index: {}]
  %s7 = inlined_call_operand.<no memory space> [shape: f32[1], index: 7, kind: input, shape index: {}]
  %s8 = inlined_call_operand.hbm [shape: f32[16,128], index: 8, kind: output, shape index: {0}]
  %s9 = inlined_call_operand.hbm [shape: f32[16,128], index: 9, kind: output, shape index: {1}]
  %10 = xla_tuple %s8, %s9
  %s11 = sld [smem:[#allocation0]]
  $region89: #{tpu_custom_call.1} parent=0
    _
  %s13 = ssub.s32 1, %s11
  %s14 = scalar_select 0, %s13, %s11
  %15 = sst [smem:[#allocation2]] %s7
  $region1: #{tpu_custom_call.1} parent=0
    #allocation3 [shape = 'u8[8192]{0}', space=vmem, size = 0x2000, scoped, tag = 'input window, operand 0']
    #allocation4 [shape = 's32[2]{0}', space=sflag, size = 0x8, scoped, tag = 'scoped memory for tpu_custom_call.1']
    #allocation5 [shape = 's32[2]{0}', space=sflag, size = 0x8, scoped, tag = 'scoped memory for tpu_custom_call.1']
    #allocation6 [shape = 'u8[65536]{0}', space=vmem, size = 0x10000, scoped, tag = 'input window, operand 1, single buffered']
    #allocation7 [shape = 's32[1]{0}', space=sflag, size = 0x4, scoped, tag = 'scoped memory for tpu_custom_call.1']
    #allocation8 [shape = 'u8[65536]{0}', space=vmem, size = 0x10000, scoped, tag = 'input window, operand 3, single buffered']
    #allocation9 [shape = 'u8[32768]{0}', space=vmem, size = 0x8000, scoped, tag = 'input window, operand 5, single buffered']
    #allocation10 [shape = 's32[1]{0}', space=sflag, size = 0x4, scoped, tag = 'scoped memory for tpu_custom_call.1']
    #allocation11 [shape = 'u8[8192]{0}', space=vmem, size = 0x2000, scoped, tag = 'output window, operand 0']
    #allocation12 [shape = 'u8[8192]{0}', space=vmem, size = 0x2000, scoped, tag = 'output window, operand 1']
    #allocation13 [shape = 's32[2]{0}', space=sflag, size = 0x8, scoped, tag = 'scoped memory for tpu_custom_call.1']
    %16 = vsyncpa [#allocation4], 0
    %s17 = scalar_lea.sflag [#allocation4], 1
    %18 = vsyncpa %s17, 0
    %19 = vsyncpa [#allocation7], 0
    %20 = vsyncpa [#allocation10], 0
    %21 = vsyncpa [#allocation5], 0
    %s22 = scalar_lea.sflag [#allocation5], 1
    %23 = vsyncpa %s22, 0
    %24 = vsyncpa [#allocation13], 0
    %s25 = scalar_lea.sflag [#allocation13], 1
    %26 = vsyncpa %s25, 0
    loop: start=0, step=1, limit=4
    $region2: #{tpu_custom_call.1} parent=1 // loop_pre_header
      _
    $region3: #{tpu_custom_call.1} parent=1 // loop_header
      %s28 = sphi 0, %s32
      %p29 = scmp.ge.s32.totalorder %s28, 4
      %s38 = sphi 0, %s40
      %s41 = sphi 0, %s38
      %s42 = sphi 0, %s41
      %s58 = sphi 0, %s42
      %s62 = sphi 0, %s62
      %s64 = sphi 0, %s62
      %s65 = sphi 0, %s64
      %s79 = sphi 0, %s65
      %s83 = sphi 0, %s83
      %s85 = sphi 0, %s83
      %s86 = sphi 0, %s85
      %s100 = sphi 0, %s86
      %s104 = sphi 0, %s104
      %s106 = sphi 0, %s104
      %s107 = sphi 0, %s106
      %s121 = sphi 0, %s107
      %s125 = sphi 0, %s125
      %s127 = sphi 0, %s125
      %s128 = sphi 0, %s127
      %s142 = sphi 0, %s128
      %s146 = sphi 0, %s146
      %s148 = sphi 0, %s146
      %s149 = sphi 0, %s148
      %s163 = sphi 0, %s149
      %s167 = sphi 0, %s167
      %s169 = sphi 0, %s167
      %s170 = sphi 0, %s169
      %s184 = sphi 0, %s170
      %s188 = sphi 0, %s188
      %s190 = sphi 0, %s188
      %s191 = sphi 0, %s190
      %s205 = sphi 0, %s191
      %s211 = sphi 0, %s213
      %s214 = sphi 0, %s211
      %s215 = sphi 0, %s214
      %s231 = sphi 0, %s215
      %s237 = sphi 0, %s239
      %s240 = sphi 0, %s237
      %s241 = sphi 0, %s240
      %s257 = sphi 0, %s241
    $region4: #{tpu_custom_call.1} parent=1 // loop_header_branch
      %31 = sbr.rel (%p29) target = $region8
    $region5: #{tpu_custom_call.1} parent=1 // loop_body
      %s33 = ssub.s32 %s28, 1
      %s34 = ssub.s32 %s28, 2
      %s35 = sadd.s32 %s28, 1
      %s36 = ssub.s32 %s28, %s35
      %p37 = scmp.eq.s32.totalorder %s36, 0
      %s39 = sadd.s32 %s38, 1
      %s40 = scalar_select %p37, %s38, %s39
      %p43 = pneg %p37
      %p44 = scmp.eq.s32.totalorder %s28, 1
      %p45 = por %p43, %p44
      %p46 = scmp.ne.s32.totalorder %s38, %s41
      %p47 = scmp.eq.s32.totalorder %s28, 0
      %p48 = por %p46, %p47
      %p49 = scmp.ne.s32.totalorder %s38, %s41
      %p50 = scmp.eq.s32.totalorder %s33, 1
      %p51 = por %p49, %p50
      %p52 = scmp.ne.s32.totalorder %s41, %s42
      %p53 = scmp.eq.s32.totalorder %s33, 0
      %p54 = por %p52, %p53
      %p55 = scmp.ne.s32.totalorder %s41, %s42
      %p56 = scmp.eq.s32.totalorder %s34, 1
      %p57 = por %p55, %p56
      %p59 = scmp.ne.s32.totalorder %s42, %s58
      %p60 = scmp.eq.s32.totalorder %s34, 0
      %p61 = por %p59, %p60
      %s63 = sadd.s32 %s62, 1
      %p66 = scmp.eq.s32.totalorder %s28, 1
      %p67 = scmp.ne.s32.totalorder %s62, %s64
      %p68 = scmp.eq.s32.totalorder %s28, 0
      %p69 = por %p67, %p68
      %p70 = scmp.ne.s32.totalorder %s62, %s64
      %p71 = scmp.eq.s32.totalorder %s33, 1
      %p72 = por %p70, %p71
      %p73 = scmp.ne.s32.totalorder %s64, %s65
      %p74 = scmp.eq.s32.totalorder %s33, 0
      %p75 = por %p73, %p74
      %p76 = scmp.ne.s32.totalorder %s64, %s65
      %p77 = scmp.eq.s32.totalorder %s34, 1
      %p78 = por %p76, %p77
      %p80 = scmp.ne.s32.totalorder %s65, %s79
      %p81 = scmp.eq.s32.totalorder %s34, 0
      %p82 = por %p80, %p81
      %s84 = sadd.s32 %s83, 1
      %p87 = scmp.eq.s32.totalorder %s28, 1
      %p88 = scmp.ne.s32.totalorder %s83, %s85
      %p89 = scmp.eq.s32.totalorder %s28, 0
      %p90 = por %p88, %p89
      %p91 = scmp.ne.s32.totalorder %s83, %s85
      %p92 = scmp.eq.s32.totalorder %s33, 1
      %p93 = por %p91, %p92
      %p94 = scmp.ne.s32.totalorder %s85, %s86
      %p95 = scmp.eq.s32.totalorder %s33, 0
      %p96 = por %p94, %p95
      %p97 = scmp.ne.s32.totalorder %s85, %s86
      %p98 = scmp.eq.s32.totalorder %s34, 1
      %p99 = por %p97, %p98
      %p101 = scmp.ne.s32.totalorder %s86, %s100
      %p102 = scmp.eq.s32.totalorder %s34, 0
      %p103 = por %p101, %p102
      %s105 = sadd.s32 %s104, 1
      %p108 = scmp.eq.s32.totalorder %s28, 1
      %p109 = scmp.ne.s32.totalorder %s104, %s106
      %p110 = scmp.eq.s32.totalorder %s28, 0
      %p111 = por %p109, %p110
      %p112 = scmp.ne.s32.totalorder %s104, %s106
      %p113 = scmp.eq.s32.totalorder %s33, 1
      %p114 = por %p112, %p113
      %p115 = scmp.ne.s32.totalorder %s106, %s107
      %p116 = scmp.eq.s32.totalorder %s33, 0
      %p117 = por %p115, %p116
      %p118 = scmp.ne.s32.totalorder %s106, %s107
      %p119 = scmp.eq.s32.totalorder %s34, 1
      %p120 = por %p118, %p119
      %p122 = scmp.ne.s32.totalorder %s107, %s121
      %p123 = scmp.eq.s32.totalorder %s34, 0
      %p124 = por %p122, %p123
      %s126 = sadd.s32 %s125, 1
      %p129 = scmp.eq.s32.totalorder %s28, 1
      %p130 = scmp.ne.s32.totalorder %s125, %s127
      %p131 = scmp.eq.s32.totalorder %s28, 0
      %p132 = por %p130, %p131
      %p133 = scmp.ne.s32.totalorder %s125, %s127
      %p134 = scmp.eq.s32.totalorder %s33, 1
      %p135 = por %p133, %p134
      %p136 = scmp.ne.s32.totalorder %s127, %s128
      %p137 = scmp.eq.s32.totalorder %s33, 0
      %p138 = por %p136, %p137
      %p139 = scmp.ne.s32.totalorder %s127, %s128
      %p140 = scmp.eq.s32.totalorder %s34, 1
      %p141 = por %p139, %p140
      %p143 = scmp.ne.s32.totalorder %s128, %s142
      %p144 = scmp.eq.s32.totalorder %s34, 0
      %p145 = por %p143, %p144
      %s147 = sadd.s32 %s146, 1
      %p150 = scmp.eq.s32.totalorder %s28, 1
      %p151 = scmp.ne.s32.totalorder %s146, %s148
      %p152 = scmp.eq.s32.totalorder %s28, 0
      %p153 = por %p151, %p152
      %p154 = scmp.ne.s32.totalorder %s146, %s148
      %p155 = scmp.eq.s32.totalorder %s33, 1
      %p156 = por %p154, %p155
      %p157 = scmp.ne.s32.totalorder %s148, %s149
      %p158 = scmp.eq.s32.totalorder %s33, 0
      %p159 = por %p157, %p158
      %p160 = scmp.ne.s32.totalorder %s148, %s149
      %p161 = scmp.eq.s32.totalorder %s34, 1
      %p162 = por %p160, %p161
      %p164 = scmp.ne.s32.totalorder %s149, %s163
      %p165 = scmp.eq.s32.totalorder %s34, 0
      %p166 = por %p164, %p165
      %s168 = sadd.s32 %s167, 1
      %p171 = scmp.eq.s32.totalorder %s28, 1
      %p172 = scmp.ne.s32.totalorder %s167, %s169
      %p173 = scmp.eq.s32.totalorder %s28, 0
      %p174 = por %p172, %p173
      %p175 = scmp.ne.s32.totalorder %s167, %s169
      %p176 = scmp.eq.s32.totalorder %s33, 1
      %p177 = por %p175, %p176
      %p178 = scmp.ne.s32.totalorder %s169, %s170
      %p179 = scmp.eq.s32.totalorder %s33, 0
      %p180 = por %p178, %p179
      %p181 = scmp.ne.s32.totalorder %s169, %s170
      %p182 = scmp.eq.s32.totalorder %s34, 1
      %p183 = por %p181, %p182
      %p185 = scmp.ne.s32.totalorder %s170, %s184
      %p186 = scmp.eq.s32.totalorder %s34, 0
      %p187 = por %p185, %p186
      %s189 = sadd.s32 %s188, 1
      %p192 = scmp.eq.s32.totalorder %s28, 1
      %p193 = scmp.ne.s32.totalorder %s188, %s190
      %p194 = scmp.eq.s32.totalorder %s28, 0
      %p195 = por %p193, %p194
      %p196 = scmp.ne.s32.totalorder %s188, %s190
      %p197 = scmp.eq.s32.totalorder %s33, 1
      %p198 = por %p196, %p197
      %p199 = scmp.ne.s32.totalorder %s190, %s191
      %p200 = scmp.eq.s32.totalorder %s33, 0
      %p201 = por %p199, %p200
      %p202 = scmp.ne.s32.totalorder %s190, %s191
      %p203 = scmp.eq.s32.totalorder %s34, 1
      %p204 = por %p202, %p203
      %p206 = scmp.ne.s32.totalorder %s191, %s205
      %p207 = scmp.eq.s32.totalorder %s34, 0
      %p208 = por %p206, %p207
      %s209 = ssub.s32 %s28, %s35
      %p210 = scmp.eq.s32.totalorder %s209, 0
      %s212 = sadd.s32 %s211, 1
      %s213 = scalar_select %p210, %s211, %s212
      %p216 = pneg %p210
      %p217 = scmp.eq.s32.totalorder %s28, 1
      %p218 = por %p216, %p217
      %p219 = scmp.ne.s32.totalorder %s211, %s214
      %p220 = scmp.eq.s32.totalorder %s28, 0
      %p221 = por %p219, %p220
      %p222 = scmp.ne.s32.totalorder %s211, %s214
      %p223 = scmp.eq.s32.totalorder %s33, 1
      %p224 = por %p222, %p223
      %p225 = scmp.ne.s32.totalorder %s214, %s215
      %p226 = scmp.eq.s32.totalorder %s33, 0
      %p227 = por %p225, %p226
      %p228 = scmp.ne.s32.totalorder %s214, %s215
      %p229 = scmp.eq.s32.totalorder %s34, 1
      %p230 = por %p228, %p229
      %p232 = scmp.ne.s32.totalorder %s215, %s231
      %p233 = scmp.eq.s32.totalorder %s34, 0
      %p234 = por %p232, %p233
      %s235 = ssub.s32 %s28, %s35
      %p236 = scmp.eq.s32.totalorder %s235, 0
      %s238 = sadd.s32 %s237, 1
      %s239 = scalar_select %p236, %s237, %s238
      %p242 = pneg %p236
      %p243 = scmp.eq.s32.totalorder %s28, 1
      %p244 = por %p242, %p243
      %p245 = scmp.ne.s32.totalorder %s237, %s240
      %p246 = scmp.eq.s32.totalorder %s28, 0
      %p247 = por %p245, %p246
      %p248 = scmp.ne.s32.totalorder %s237, %s240
      %p249 = scmp.eq.s32.totalorder %s33, 1
      %p250 = por %p248, %p249
      %p251 = scmp.ne.s32.totalorder %s240, %s241
      %p252 = scmp.eq.s32.totalorder %s33, 0
      %p253 = por %p251, %p252
      %p254 = scmp.ne.s32.totalorder %s240, %s241
      %p255 = scmp.eq.s32.totalorder %s34, 1
      %p256 = por %p254, %p255
      %p258 = scmp.ne.s32.totalorder %s241, %s257
      %p259 = scmp.eq.s32.totalorder %s34, 0
      %p260 = por %p258, %p259
      %p261 = scmp.le.s32.totalorder 1, %s28
      %p262 = scmp.lt.s32.totalorder %s28, 3
      %p263 = pnand %p261, %p262
      %p264 = pneg %p263
      // Predicated region
      $region9: #{tpu_custom_call.1} parent=5 // pred_check
        _
      $region10: #{tpu_custom_call.1} parent=5 // pred_check_branch
        %266 = sbr.rel (%p263) target = $region12
      $region11: #{tpu_custom_call.1} parent=5 // pred_region
        %s267 = ssub.s32 %s28, 1
        // Predicated region
        $region13: #{tpu_custom_call.1} parent=11 // pred_check
          %p268 = pneg %p75
        $region14: #{tpu_custom_call.1} parent=11 // pred_check_branch
          %270 = sbr.rel (%p268) target = $region16
        $region15: #{tpu_custom_call.1} parent=11 // pred_region
          %s272 = ssub.s32 2048, 2048
          %273 = vsyncadd [#allocation7], %s272
          %s274 = sshll.u32 [#allocation6], 4
          %s275 = int_to_ptr.vmem [resolvable:$true] %s274
          %280 = dma.hbm_to_vmem [thread:$0]  %s1, 2048, %s275, [#allocation7], 128, 128, 8
        $region16: #{tpu_custom_call.1} parent=11 // pred_fallthru
          _
        // Predicated region
        $region17: #{tpu_custom_call.1} parent=11 // pred_check
          %p281 = pneg %p96
        $region18: #{tpu_custom_call.1} parent=11 // pred_check_branch
          %283 = sbr.rel (%p281) target = $region20
        $region19: #{tpu_custom_call.1} parent=11 // pred_region
          _
        $region20: #{tpu_custom_call.1} parent=11 // pred_fallthru
          _
        // Predicated region
        $region21: #{tpu_custom_call.1} parent=11 // pred_check
          %p284 = pneg %p117
        $region22: #{tpu_custom_call.1} parent=11 // pred_check_branch
          %286 = sbr.rel (%p284) target = $region24
        $region23: #{tpu_custom_call.1} parent=11 // pred_region
          %s288 = ssub.s32 2048, 2048
          %289 = vsyncadd [#allocation7], %s288
          %s290 = sshll.u32 [#allocation8], 4
          %s291 = int_to_ptr.vmem [resolvable:$true] %s290
          %296 = dma.hbm_to_vmem [thread:$0]  %s3, 2048, %s291, [#allocation7], 64, 64, 4
        $region24: #{tpu_custom_call.1} parent=11 // pred_fallthru
          _
        // Predicated region
        $region25: #{tpu_custom_call.1} parent=11 // pred_check
          %p297 = pneg %p138
        $region26: #{tpu_custom_call.1} parent=11 // pred_check_branch
          %299 = sbr.rel (%p297) target = $region28
        $region27: #{tpu_custom_call.1} parent=11 // pred_region
          _
        $region28: #{tpu_custom_call.1} parent=11 // pred_fallthru
          _
        // Predicated region
        $region29: #{tpu_custom_call.1} parent=11 // pred_check
          %p300 = pneg %p159
        $region30: #{tpu_custom_call.1} parent=11 // pred_check_branch
          %302 = sbr.rel (%p300) target = $region32
        $region31: #{tpu_custom_call.1} parent=11 // pred_region
          %s304 = ssub.s32 1024, 1024
          %305 = vsyncadd [#allocation10], %s304
          %s306 = sshll.u32 [#allocation9], 4
          %s307 = int_to_ptr.vmem [resolvable:$true] %s306
          %312 = dma.hbm_to_vmem [thread:$0]  %s5, 1024, %s307, [#allocation10], 64, 64, 4
        $region32: #{tpu_custom_call.1} parent=11 // pred_fallthru
          _
        // Predicated region
        $region33: #{tpu_custom_call.1} parent=11 // pred_check
          %p313 = pneg %p180
        $region34: #{tpu_custom_call.1} parent=11 // pred_check_branch
          %315 = sbr.rel (%p313) target = $region36
        $region35: #{tpu_custom_call.1} parent=11 // pred_region
          _
        $region36: #{tpu_custom_call.1} parent=11 // pred_fallthru
          _
        // Predicated region
        $region37: #{tpu_custom_call.1} parent=11 // pred_check
          %p316 = pneg %p201
        $region38: #{tpu_custom_call.1} parent=11 // pred_check_branch
          %318 = sbr.rel (%p316) target = $region40
        $region39: #{tpu_custom_call.1} parent=11 // pred_region
          _
        $region40: #{tpu_custom_call.1} parent=11 // pred_fallthru
          _
      $region12: #{tpu_custom_call.1} parent=5 // pred_fallthru
        _
      %p319 = scmp.lt.s32.totalorder %s28, 2
      // Predicated region
      $region41: #{tpu_custom_call.1} parent=5 // pred_check
        %p320 = pneg %p319
      $region42: #{tpu_custom_call.1} parent=5 // pred_check_branch
        %322 = sbr.rel (%p320) target = $region44
      $region43: #{tpu_custom_call.1} parent=5 // pred_region
        // Predicated region
        $region45: #{tpu_custom_call.1} parent=43 // pred_check
          %p323 = pneg %p48
        $region46: #{tpu_custom_call.1} parent=43 // pred_check_branch
          %325 = sbr.rel (%p323) target = $region48
        $region47: #{tpu_custom_call.1} parent=43 // pred_region
          %s326 = sand.u32 %s38, 1
          %s327 = scalar_lea.sflag [#allocation4], %s326
          %s328 = sand.u32 %s38, 1
          %s329 = smul.addr %s328, 8
          %s330 = scalar_lea.vmem [#allocation3], %s329
          %s332 = ssub.s32 128, 128
          %333 = vsyncadd %s327, %s332
          %s334 = smul.addr %s28, 128
          %s335 = scalar_lea.hbm %s0, %s334
          %s337 = sshll.u32 %s330, 4
          %s338 = int_to_ptr.vmem [resolvable:$true] %s337
          %340 = dma.hbm_to_vmem [thread:$0]  %s335, 128, %s338, %s327
        $region48: #{tpu_custom_call.1} parent=43 // pred_fallthru
          _
      $region44: #{tpu_custom_call.1} parent=5 // pred_fallthru
        _
      %p341 = scmp.le.s32.totalorder 1, %s28
      %p342 = scmp.lt.s32.totalorder %s28, 3
      %p343 = pnand %p341, %p342
      %p344 = pneg %p343
      // Predicated region
      $region49: #{tpu_custom_call.1} parent=5 // pred_check
        _
      $region50: #{tpu_custom_call.1} parent=5 // pred_check_branch
        %346 = sbr.rel (%p343) target = $region52
      $region51: #{tpu_custom_call.1} parent=5 // pred_region
        %s347 = ssub.s32 %s28, 1
        %s348 = sand.u32 %s41, 1
        %s349 = scalar_lea.sflag [#allocation4], %s348
        %s350 = sand.u32 %s41, 1
        %s351 = smul.addr %s350, 8
        %s352 = scalar_lea.vmem [#allocation3], %s351
        // Predicated region
        $region53: #{tpu_custom_call.1} parent=51 // pred_check
          %p353 = pneg %p54
        $region54: #{tpu_custom_call.1} parent=51 // pred_check_branch
          %355 = sbr.rel (%p353) target = $region56
        $region55: #{tpu_custom_call.1} parent=51 // pred_region
          %356 = dma.done %s349, 128
        $region56: #{tpu_custom_call.1} parent=51 // pred_fallthru
          _
        // Predicated region
        $region57: #{tpu_custom_call.1} parent=51 // pred_check
          %p357 = pneg %p75
        $region58: #{tpu_custom_call.1} parent=51 // pred_check_branch
          %359 = sbr.rel (%p357) target = $region60
        $region59: #{tpu_custom_call.1} parent=51 // pred_region
          %360 = dma.done [#allocation7], 2048
        $region60: #{tpu_custom_call.1} parent=51 // pred_fallthru
          _
        // Predicated region
        $region61: #{tpu_custom_call.1} parent=51 // pred_check
          %p361 = pneg %p117
        $region62: #{tpu_custom_call.1} parent=51 // pred_check_branch
          %363 = sbr.rel (%p361) target = $region64
        $region63: #{tpu_custom_call.1} parent=51 // pred_region
          %364 = dma.done [#allocation7], 2048
        $region64: #{tpu_custom_call.1} parent=51 // pred_fallthru
          _
        // Predicated region
        $region65: #{tpu_custom_call.1} parent=51 // pred_check
          %p365 = pneg %p159
        $region66: #{tpu_custom_call.1} parent=51 // pred_check_branch
          %367 = sbr.rel (%p365) target = $region68
        $region67: #{tpu_custom_call.1} parent=51 // pred_region
          %368 = dma.done [#allocation10], 1024
        $region68: #{tpu_custom_call.1} parent=51 // pred_fallthru
          _
        %s369 = sand.u32 %s41, 1
        %s370 = scalar_lea.sflag [#allocation4], %s369
        %s371 = sand.u32 %s41, 1
        %s372 = smul.addr %s371, 8
        %s373 = scalar_lea.vmem [#allocation3], %s372
        %p374 = pneg %p54
        %p375 = pneg %p51
        %p376 = pneg %p75
        %p377 = pneg %p72
        %p378 = pneg %p96
        %p379 = pneg %p93
        %p380 = pneg %p117
        %p381 = pneg %p114
        %p382 = pneg %p138
        %p383 = pneg %p135
        %p384 = pneg %p159
        %p385 = pneg %p156
        %p386 = pneg %p180
        %p387 = pneg %p177
        %p388 = pneg %p201
        %p389 = pneg %p198
        %p390 = pneg %p227
        %p391 = pneg %p224
        %s392 = sand.u32 %s214, 1
        %s393 = scalar_lea.sflag [#allocation5], %s392
        %s394 = sand.u32 %s214, 1
        %s395 = smul.addr %s394, 8
        %s396 = scalar_lea.vmem [#allocation11], %s395
        %p397 = pneg %p253
        %p398 = pneg %p250
        %s399 = sand.u32 %s240, 1
        %s400 = scalar_lea.sflag [#allocation13], %s399
        %s401 = sand.u32 %s240, 1
        %s402 = smul.addr %s401, 8
        %s403 = scalar_lea.vmem [#allocation12], %s402
        %v405 = vld [vmem:[%s352] sm:$0xff]
        %v406 = vpack.c.bf16 %v405, %v405
        %v407 = vld [vmem:[#allocation6] sm:$0xff]
        %v408 = vld [vmem:[#allocation6 + $0x8] sm:$0xff]
        %v409 = vld [vmem:[#allocation6 + $0x10] sm:$0xff]
        %v410 = vld [vmem:[#allocation6 + $0x18] sm:$0xff]
        %v411 = vld [vmem:[#allocation6 + $0x20] sm:$0xff]
        %v412 = vld [vmem:[#allocation6 + $0x28] sm:$0xff]
        %v413 = vld [vmem:[#allocation6 + $0x30] sm:$0xff]
        %v414 = vld [vmem:[#allocation6 + $0x38] sm:$0xff]
        %v415 = vld [vmem:[#allocation6 + $0x40] sm:$0xff]
        %v416 = vld [vmem:[#allocation6 + $0x48] sm:$0xff]
        %v417 = vld [vmem:[#allocation6 + $0x50] sm:$0xff]
        %v418 = vld [vmem:[#allocation6 + $0x58] sm:$0xff]
        %v419 = vld [vmem:[#allocation6 + $0x60] sm:$0xff]
        %v420 = vld [vmem:[#allocation6 + $0x68] sm:$0xff]
        %v421 = vld [vmem:[#allocation6 + $0x70] sm:$0xff]
        %v422 = vld [vmem:[#allocation6 + $0x78] sm:$0xff]
        %v423 = vld [vmem:[%s2] sm:$0x3]
        %v425 = vlaneseq
        %v426 = vshrl.u32 %v425, 7
        %v427 = vsub.s32 0, %v426
        %v428 = vrot.slane %v423, %v427
        %v429 = vlaneseq
        %v430 = vshrl.u32 %v429, 7
        %v431 = vsub.s32 1, %v430
        %v432 = vrot.slane %v423, %v431
        %v451 = vunpack.c.l.b16 %v407
        %v452 = vunpack.c.h.b16 %v407
        %v453 = vunpack.c.l.b16 %v408
        %v454 = vunpack.c.h.b16 %v408
        %v455 = vunpack.c.l.b16 %v409
        %v456 = vunpack.c.h.b16 %v409
        %v457 = vunpack.c.l.b16 %v410
        %v458 = vunpack.c.h.b16 %v410
        %v459 = vunpack.c.l.b16 %v411
        %v460 = vunpack.c.h.b16 %v411
        %v461 = vunpack.c.l.b16 %v412
        %v462 = vunpack.c.h.b16 %v412
        %v463 = vunpack.c.l.b16 %v413
        %v464 = vunpack.c.h.b16 %v413
        %v465 = vunpack.c.l.b16 %v414
        %v466 = vunpack.c.h.b16 %v414
        %v467 = vunpack.c.l.b16 %v415
        %v468 = vunpack.c.h.b16 %v415
        %v469 = vunpack.c.l.b16 %v416
        %v470 = vunpack.c.h.b16 %v416
        %v471 = vunpack.c.l.b16 %v417
        %v472 = vunpack.c.h.b16 %v417
        %v473 = vunpack.c.l.b16 %v418
        %v474 = vunpack.c.h.b16 %v418
        %v475 = vunpack.c.l.b16 %v419
        %v476 = vunpack.c.h.b16 %v419
        %v477 = vunpack.c.l.b16 %v420
        %v478 = vunpack.c.h.b16 %v420
        %v479 = vunpack.c.l.b16 %v421
        %v480 = vunpack.c.h.b16 %v421
        %v481 = vunpack.c.l.b16 %v422
        %v482 = vunpack.c.h.b16 %v422
        %v483 = vpack.c.b16 %v453, %v451
        %v484 = vpack.c.b16 %v454, %v452
        %v485 = vpack.c.b16 %v457, %v455
        %v486 = vpack.c.b16 %v458, %v456
        %v487 = vpack.c.b16 %v461, %v459
        %v488 = vpack.c.b16 %v462, %v460
        %v489 = vpack.c.b16 %v465, %v463
        %v490 = vpack.c.b16 %v466, %v464
        %v491 = vpack.c.b16 %v469, %v467
        %v492 = vpack.c.b16 %v470, %v468
        %v493 = vpack.c.b16 %v473, %v471
        %v494 = vpack.c.b16 %v474, %v472
        %v495 = vpack.c.b16 %v477, %v475
        %v496 = vpack.c.b16 %v478, %v476
        %v497 = vpack.c.b16 %v481, %v479
        %v498 = vpack.c.b16 %v482, %v480
        %515 = vmatprep.subr.bf16.mxu0 %v484
        %516 = vmatpush1.bf16.msra.mxu0 %v483
        %517 = vmatprep.subr.bf16.mxu0 %v486
        %518 = vmatpush1.bf16.msra.mxu0 %v485
        %519 = vmatprep.subr.bf16.mxu0 %v488
        %520 = vmatpush1.bf16.msra.mxu0 %v487
        %521 = vmatprep.subr.bf16.mxu0 %v490
        %522 = vmatpush1.bf16.msra.mxu0 %v489
        %523 = vmatprep.subr.bf16.mxu0 %v492
        %524 = vmatpush1.bf16.msra.mxu0 %v491
        %525 = vmatprep.subr.bf16.mxu0 %v494
        %526 = vmatpush1.bf16.msra.mxu0 %v493
        %527 = vmatprep.subr.bf16.mxu0 %v496
        %528 = vmatpush1.bf16.msra.mxu0 %v495
        %529 = vmatprep.subr.bf16.mxu0 %v498
        %530 = vmatpush1.bf16.msra.mxu0 %v497
        %531 = vmatprep.subr.bf16.mxu0 0
        %532 = vmatpush1.bf16.msra.mxu0 0
        %533 = vmatprep.subr.bf16.mxu0 0
        %534 = vmatpush1.bf16.msra.mxu0 0
        %535 = vmatprep.subr.bf16.mxu0 0
        %536 = vmatpush1.bf16.msra.mxu0 0
        %537 = vmatprep.subr.bf16.mxu0 0
        %538 = vmatpush1.bf16.msra.mxu0 0
        %539 = vmatprep.subr.bf16.mxu0 0
        %540 = vmatpush1.bf16.msra.mxu0 0
        %541 = vmatprep.subr.bf16.mxu0 0
        %542 = vmatpush1.bf16.msra.mxu0 0
        %543 = vmatprep.subr.bf16.mxu0 0
        %544 = vmatpush1.bf16.msra.mxu0 0
        %545 = vmatprep.subr.bf16.mxu0 0
        %546 = vmatpush1.bf16.msra.mxu0 0
        %547 = vmatprep.mubr.bf16.mxu0 0
        %548 = vmatmul.mubr.bf16.gmra.mrb[0].mxu0 %v406
        %v549 = vpop.f32.mrb[0].mxu0
        %v550 = vadd.f32 %v428, %v549
        %v551 = vpop.f32.mrb[0].mxu0
        %v552 = vadd.f32 %v432, %v551
        %v553 = vpop.f32.mrb[0].mxu0
        %v554 = vpop.f32.mrb[0].mxu0
        %555 = vdwg.mxu0
        %v556 = vmax.f32 %v550, 0.0
        %v557 = vmax.f32 %v552, 0.0
        %v558 = vpack.c.bf16 %v556, %v556
        %v559 = vpack.c.bf16 %v557, %v557
        %v560 = vld [vmem:[#allocation8] sm:$0xf]
        %v561 = vld [vmem:[#allocation8 + $0x4] sm:$0xf]
        %v562 = vld [vmem:[#allocation8 + $0x8] sm:$0xf]
        %v563 = vld [vmem:[#allocation8 + $0xc] sm:$0xf]
        %v564 = vld [vmem:[#allocation8 + $0x10] sm:$0xf]
        %v565 = vld [vmem:[#allocation8 + $0x14] sm:$0xf]
        %v566 = vld [vmem:[#allocation8 + $0x18] sm:$0xf]
        %v567 = vld [vmem:[#allocation8 + $0x1c] sm:$0xf]
        %v568 = vld [vmem:[#allocation8 + $0x20] sm:$0xf]
        %v569 = vld [vmem:[#allocation8 + $0x24] sm:$0xf]
        %v570 = vld [vmem:[#allocation8 + $0x28] sm:$0xf]
        %v571 = vld [vmem:[#allocation8 + $0x2c] sm:$0xf]
        %v572 = vld [vmem:[#allocation8 + $0x30] sm:$0xf]
        %v573 = vld [vmem:[#allocation8 + $0x34] sm:$0xf]
        %v574 = vld [vmem:[#allocation8 + $0x38] sm:$0xf]
        %v575 = vld [vmem:[#allocation8 + $0x3c] sm:$0xf]
        %v576 = vld [vmem:[#allocation8 + $0x40] sm:$0xf]
        %v577 = vld [vmem:[#allocation8 + $0x44] sm:$0xf]
        %v578 = vld [vmem:[#allocation8 + $0x48] sm:$0xf]
        %v579 = vld [vmem:[#allocation8 + $0x4c] sm:$0xf]
        %v580 = vld [vmem:[#allocation8 + $0x50] sm:$0xf]
        %v581 = vld [vmem:[#allocation8 + $0x54] sm:$0xf]
        %v582 = vld [vmem:[#allocation8 + $0x58] sm:$0xf]
        %v583 = vld [vmem:[#allocation8 + $0x5c] sm:$0xf]
        %v584 = vld [vmem:[#allocation8 + $0x60] sm:$0xf]
        %v585 = vld [vmem:[#allocation8 + $0x64] sm:$0xf]
        %v586 = vld [vmem:[#allocation8 + $0x68] sm:$0xf]
        %v587 = vld [vmem:[#allocation8 + $0x6c] sm:$0xf]
        %v588 = vld [vmem:[#allocation8 + $0x70] sm:$0xf]
        %v589 = vld [vmem:[#allocation8 + $0x74] sm:$0xf]
        %v590 = vld [vmem:[#allocation8 + $0x78] sm:$0xf]
        %v591 = vld [vmem:[#allocation8 + $0x7c] sm:$0xf]
        %v592 = vld [vmem:[%s4] sm:$0x1]
        %v594 = vlaneseq
        %v595 = vshrl.u32 %v594, 7
        %v596 = vsub.s32 0, %v595
        %v597 = vrot.slane %v592, %v596
        %v631 = vunpack.c.l.b16 %v560
        %v632 = vunpack.c.l.b16 %v561
        %v633 = vunpack.c.l.b16 %v562
        %v634 = vunpack.c.l.b16 %v563
        %v635 = vunpack.c.l.b16 %v564
        %v636 = vunpack.c.l.b16 %v565
        %v637 = vunpack.c.l.b16 %v566
        %v638 = vunpack.c.l.b16 %v567
        %v639 = vunpack.c.l.b16 %v568
        %v640 = vunpack.c.l.b16 %v569
        %v641 = vunpack.c.l.b16 %v570
        %v642 = vunpack.c.l.b16 %v571
        %v643 = vunpack.c.l.b16 %v572
        %v644 = vunpack.c.l.b16 %v573
        %v645 = vunpack.c.l.b16 %v574
        %v646 = vunpack.c.l.b16 %v575
        %v647 = vunpack.c.l.b16 %v576
        %v648 = vunpack.c.l.b16 %v577
        %v649 = vunpack.c.l.b16 %v578
        %v650 = vunpack.c.l.b16 %v579
        %v651 = vunpack.c.l.b16 %v580
        %v652 = vunpack.c.l.b16 %v581
        %v653 = vunpack.c.l.b16 %v582
        %v654 = vunpack.c.l.b16 %v583
        %v655 = vunpack.c.l.b16 %v584
        %v656 = vunpack.c.l.b16 %v585
        %v657 = vunpack.c.l.b16 %v586
        %v658 = vunpack.c.l.b16 %v587
        %v659 = vunpack.c.l.b16 %v588
        %v660 = vunpack.c.l.b16 %v589
        %v661 = vunpack.c.l.b16 %v590
        %v662 = vunpack.c.l.b16 %v591
        %v663 = vpack.c.b16 %v632, %v631
        %v664 = vpack.c.b16 %v634, %v633
        %v665 = vpack.c.b16 %v636, %v635
        %v666 = vpack.c.b16 %v638, %v637
        %v667 = vpack.c.b16 %v640, %v639
        %v668 = vpack.c.b16 %v642, %v641
        %v669 = vpack.c.b16 %v644, %v643
        %v670 = vpack.c.b16 %v646, %v645
        %v671 = vpack.c.b16 %v648, %v647
        %v672 = vpack.c.b16 %v650, %v649
        %v673 = vpack.c.b16 %v652, %v651
        %v674 = vpack.c.b16 %v654, %v653
        %v675 = vpack.c.b16 %v656, %v655
        %v676 = vpack.c.b16 %v658, %v657
        %v677 = vpack.c.b16 %v660, %v659
        %v678 = vpack.c.b16 %v662, %v661
        %695 = vmatprep.subr.bf16.mxu0 0
        %696 = vmatpush1.bf16.msra.mxu0 %v663
        %697 = vmatprep.subr.bf16.mxu0 0
        %698 = vmatpush1.bf16.msra.mxu0 %v664
        %699 = vmatprep.subr.bf16.mxu0 0
        %700 = vmatpush1.bf16.msra.mxu0 %v665
        %701 = vmatprep.subr.bf16.mxu0 0
        %702 = vmatpush1.bf16.msra.mxu0 %v666
        %703 = vmatprep.subr.bf16.mxu0 0
        %704 = vmatpush1.bf16.msra.mxu0 %v667
        %705 = vmatprep.subr.bf16.mxu0 0
        %706 = vmatpush1.bf16.msra.mxu0 %v668
        %707 = vmatprep.subr.bf16.mxu0 0
        %708 = vmatpush1.bf16.msra.mxu0 %v669
        %709 = vmatprep.subr.bf16.mxu0 0
        %710 = vmatpush1.bf16.msra.mxu0 %v670
        %711 = vmatprep.subr.bf16.mxu0 0
        %712 = vmatpush1.bf16.msra.mxu0 %v671
        %713 = vmatprep.subr.bf16.mxu0 0
        %714 = vmatpush1.bf16.msra.mxu0 %v672
        %715 = vmatprep.subr.bf16.mxu0 0
        %716 = vmatpush1.bf16.msra.mxu0 %v673
        %717 = vmatprep.subr.bf16.mxu0 0
        %718 = vmatpush1.bf16.msra.mxu0 %v674
        %719 = vmatprep.subr.bf16.mxu0 0
        %720 = vmatpush1.bf16.msra.mxu0 %v675
        %721 = vmatprep.subr.bf16.mxu0 0
        %722 = vmatpush1.bf16.msra.mxu0 %v676
        %723 = vmatprep.subr.bf16.mxu0 0
        %724 = vmatpush1.bf16.msra.mxu0 %v677
        %725 = vmatprep.subr.bf16.mxu0 0
        %726 = vmatpush1.bf16.msra.mxu0 %v678
        %727 = vmatprep.mubr.bf16.mxu0 %v559
        %728 = vmatmul.mubr.bf16.gmra.mrb[0].mxu0 %v558
        %v729 = vpop.f32.mrb[0].mxu0
        %v730 = vadd.f32 %v597, %v729
        %v731 = vpop.f32.mrb[0].mxu0
        %v732 = vpop.f32.mrb[0].mxu0
        %v733 = vpop.f32.mrb[0].mxu0
        %734 = vdwg.mxu0
        %v735 = vmax.f32 %v730, 0.0
        %v736 = vpack.c.bf16 %v735, %v735
        %v737 = vld [vmem:[#allocation9] sm:$0xf]
        %v738 = vld [vmem:[#allocation9 + $0x4] sm:$0xf]
        %v739 = vld [vmem:[#allocation9 + $0x8] sm:$0xf]
        %v740 = vld [vmem:[#allocation9 + $0xc] sm:$0xf]
        %v741 = vld [vmem:[#allocation9 + $0x10] sm:$0xf]
        %v742 = vld [vmem:[#allocation9 + $0x14] sm:$0xf]
        %v743 = vld [vmem:[#allocation9 + $0x18] sm:$0xf]
        %v744 = vld [vmem:[#allocation9 + $0x1c] sm:$0xf]
        %v745 = vld [vmem:[#allocation9 + $0x20] sm:$0xf]
        %v746 = vld [vmem:[#allocation9 + $0x24] sm:$0xf]
        %v747 = vld [vmem:[#allocation9 + $0x28] sm:$0xf]
        %v748 = vld [vmem:[#allocation9 + $0x2c] sm:$0xf]
        %v749 = vld [vmem:[#allocation9 + $0x30] sm:$0xf]
        %v750 = vld [vmem:[#allocation9 + $0x34] sm:$0xf]
        %v751 = vld [vmem:[#allocation9 + $0x38] sm:$0xf]
        %v752 = vld [vmem:[#allocation9 + $0x3c] sm:$0xf]
        %v753 = vld [vmem:[%s6] sm:$0x1]
        %v755 = vlaneseq
        %v756 = vshrl.u32 %v755, 7
        %v757 = vsub.s32 0, %v756
        %v758 = vrot.slane %v753, %v757
        %v776 = vunpack.c.l.b16 %v737
        %v777 = vunpack.c.l.b16 %v738
        %v778 = vunpack.c.l.b16 %v739
        %v779 = vunpack.c.l.b16 %v740
        %v780 = vunpack.c.l.b16 %v741
        %v781 = vunpack.c.l.b16 %v742
        %v782 = vunpack.c.l.b16 %v743
        %v783 = vunpack.c.l.b16 %v744
        %v784 = vunpack.c.l.b16 %v745
        %v785 = vunpack.c.l.b16 %v746
        %v786 = vunpack.c.l.b16 %v747
        %v787 = vunpack.c.l.b16 %v748
        %v788 = vunpack.c.l.b16 %v749
        %v789 = vunpack.c.l.b16 %v750
        %v790 = vunpack.c.l.b16 %v751
        %v791 = vunpack.c.l.b16 %v752
        %v792 = vpack.c.b16 %v777, %v776
        %v793 = vpack.c.b16 %v779, %v778
        %v794 = vpack.c.b16 %v781, %v780
        %v795 = vpack.c.b16 %v783, %v782
        %v796 = vpack.c.b16 %v785, %v784
        %v797 = vpack.c.b16 %v787, %v786
        %v798 = vpack.c.b16 %v789, %v788
        %v799 = vpack.c.b16 %v791, %v790
        %808 = vmatprep.subr.bf16.mxu0 0
        %809 = vmatpush1.bf16.msra.mxu0 %v792
        %810 = vmatprep.subr.bf16.mxu0 0
        %811 = vmatpush1.bf16.msra.mxu0 %v793
        %812 = vmatprep.subr.bf16.mxu0 0
        %813 = vmatpush1.bf16.msra.mxu0 %v794
        %814 = vmatprep.subr.bf16.mxu0 0
        %815 = vmatpush1.bf16.msra.mxu0 %v795
        %816 = vmatprep.subr.bf16.mxu0 0
        %817 = vmatpush1.bf16.msra.mxu0 %v796
        %818 = vmatprep.subr.bf16.mxu0 0
        %819 = vmatpush1.bf16.msra.mxu0 %v797
        %820 = vmatprep.subr.bf16.mxu0 0
        %821 = vmatpush1.bf16.msra.mxu0 %v798
        %822 = vmatprep.subr.bf16.mxu0 0
        %823 = vmatpush1.bf16.msra.mxu0 %v799
        %824 = vmatprep.subr.bf16.mxu0 0
        %825 = vmatpush1.bf16.msra.mxu0 0
        %826 = vmatprep.subr.bf16.mxu0 0
        %827 = vmatpush1.bf16.msra.mxu0 0
        %828 = vmatprep.subr.bf16.mxu0 0
        %829 = vmatpush1.bf16.msra.mxu0 0
        %830 = vmatprep.subr.bf16.mxu0 0
        %831 = vmatpush1.bf16.msra.mxu0 0
        %832 = vmatprep.subr.bf16.mxu0 0
        %833 = vmatpush1.bf16.msra.mxu0 0
        %834 = vmatprep.subr.bf16.mxu0 0
        %835 = vmatpush1.bf16.msra.mxu0 0
        %836 = vmatprep.subr.bf16.mxu0 0
        %837 = vmatpush1.bf16.msra.mxu0 0
        %838 = vmatprep.subr.bf16.mxu0 0
        %839 = vmatpush1.bf16.msra.mxu0 0
        %840 = vmatprep.mubr.bf16.mxu0 0
        %841 = vmatmul.mubr.bf16.gmra.mrb[0].mxu0 %v736
        %v842 = vpop.f32.mrb[0].mxu0
        %v843 = vadd.f32 %v758, %v842
        %v844 = vpop.f32.mrb[0].mxu0
        %v845 = vpop.f32.mrb[0].mxu0
        %v846 = vpop.f32.mrb[0].mxu0
        %847 = vdwg.mxu0
        %v848 = vsub.f32 0.0, %v843
        %v849 = vmul.f32 %v848, 1.442695
        %v850 = vpow.pop %v849
        %v851 = vadd.f32 %v850, 1.0
        %v852 = vrcp.pop %v851
        %s853 = sld [smem:[#allocation2]]
        %v854 = vstv %s853
        %v855 = vmul.f32 %v852, %v854
        %v856 = vsub.f32 0.0, %v855
        %v857 = vmul.f32 %v856, 1.442695
        %v858 = vpow.pop %v857
        %v859 = vadd.f32 %v858, 1.0
        %v860 = vrcp.pop %v859
        %861 = vst [vmem:[%s403] sm:$0xff] %v860
        %v862 = vld [vmem:[%s352] sm:$0xff]
        %v863 = vmul.f32 %v862, %v860
        %864 = vst [vmem:[%s396] sm:$0xff] %v863
        %s865 = sand.u32 %s214, 1
        %s866 = scalar_lea.sflag [#allocation5], %s865
        %s867 = sand.u32 %s214, 1
        %s868 = smul.addr %s867, 8
        %s869 = scalar_lea.vmem [#allocation11], %s868
        %s870 = sand.u32 %s240, 1
        %s871 = scalar_lea.sflag [#allocation13], %s870
        %s872 = sand.u32 %s240, 1
        %s873 = smul.addr %s872, 8
        %s874 = scalar_lea.vmem [#allocation12], %s873
        // Predicated region
        $region69: #{tpu_custom_call.1} parent=51 // pred_check
          %p875 = pneg %p224
        $region70: #{tpu_custom_call.1} parent=51 // pred_check_branch
          %877 = sbr.rel (%p875) target = $region72
        $region71: #{tpu_custom_call.1} parent=51 // pred_region
          %s879 = ssub.s32 128, 128
          %880 = vsyncadd %s866, %s879
          %s881 = smul.addr %s33, 128
          %s882 = scalar_lea.hbm %s8, %s881
          %s884 = sshll.u32 %s869, 4
          %s885 = int_to_ptr.vmem [resolvable:$true] %s884
          %887 = dma.vmem_to_hbm [thread:$0]  %s885, 128, %s882, %s866
        $region72: #{tpu_custom_call.1} parent=51 // pred_fallthru
          _
        // Predicated region
        $region73: #{tpu_custom_call.1} parent=51 // pred_check
          %p888 = pneg %p250
        $region74: #{tpu_custom_call.1} parent=51 // pred_check_branch
          %890 = sbr.rel (%p888) target = $region76
        $region75: #{tpu_custom_call.1} parent=51 // pred_region
          %s892 = ssub.s32 128, 128
          %893 = vsyncadd %s871, %s892
          %s894 = smul.addr %s33, 128
          %s895 = scalar_lea.hbm %s9, %s894
          %s897 = sshll.u32 %s874, 4
          %s898 = int_to_ptr.vmem [resolvable:$true] %s897
          %900 = dma.vmem_to_hbm [thread:$0]  %s898, 128, %s895, %s871
        $region76: #{tpu_custom_call.1} parent=51 // pred_fallthru
          _
      $region52: #{tpu_custom_call.1} parent=5 // pred_fallthru
        _
      %p901 = scmp.le.s32.totalorder 2, %s28
      // Predicated region
      $region77: #{tpu_custom_call.1} parent=5 // pred_check
        %p902 = pneg %p901
      $region78: #{tpu_custom_call.1} parent=5 // pred_check_branch
        %904 = sbr.rel (%p902) target = $region80
      $region79: #{tpu_custom_call.1} parent=5 // pred_region
        %s905 = ssub.s32 %s28, 2
        // Predicated region
        $region81: #{tpu_custom_call.1} parent=79 // pred_check
          %p906 = pneg %p230
        $region82: #{tpu_custom_call.1} parent=79 // pred_check_branch
          %908 = sbr.rel (%p906) target = $region84
        $region83: #{tpu_custom_call.1} parent=79 // pred_region
          %s909 = sand.u32 %s215, 1
          %s910 = scalar_lea.sflag [#allocation5], %s909
          %s911 = sand.u32 %s215, 1
          %s912 = smul.addr %s911, 8
          %s913 = scalar_lea.vmem [#allocation11], %s912
          %914 = dma.done %s910, 128
        $region84: #{tpu_custom_call.1} parent=79 // pred_fallthru
          _
        // Predicated region
        $region85: #{tpu_custom_call.1} parent=79 // pred_check
          %p915 = pneg %p256
        $region86: #{tpu_custom_call.1} parent=79 // pred_check_branch
          %917 = sbr.rel (%p915) target = $region88
        $region87: #{tpu_custom_call.1} parent=79 // pred_region
          %s918 = sand.u32 %s241, 1
          %s919 = scalar_lea.sflag [#allocation13], %s918
          %s920 = sand.u32 %s241, 1
          %s921 = smul.addr %s920, 8
          %s922 = scalar_lea.vmem [#allocation12], %s921
          %923 = dma.done %s919, 128
        $region88: #{tpu_custom_call.1} parent=79 // pred_fallthru
          _
      $region80: #{tpu_custom_call.1} parent=5 // pred_fallthru
        _
    $region6: #{tpu_custom_call.1} parent=1 // loop_footer
      %s32 = sadd.s32 1, %s28
    $region7: #{tpu_custom_call.1} parent=1 // loop_footer_branch
      %27 = sbr.rel target = $region3
    $region8: #{tpu_custom_call.1} parent=1 // loop_exit
      _
    %924 = vsyncpa [#allocation4], 1
    %s925 = scalar_lea.sflag [#allocation4], 1
    %926 = vsyncpa %s925, 1
    %927 = vsyncpa [#allocation7], 1
    %928 = vsyncpa [#allocation10], 1
    %929 = vsyncpa [#allocation5], 1
    %s930 = scalar_lea.sflag [#allocation5], 1
    %931 = vsyncpa %s930, 1
    %932 = vsyncpa [#allocation13], 1
    %s933 = scalar_lea.sflag [#allocation13], 1
    %934 = vsyncpa %s933, 1

</llo_original>
